<compile_context>
chip_gen: v7x
topology: tpu7x:2x2x1
jax: 0.10.0
libtpu: 0.0.40
codegen_flags: <defaults>
</compile_context>

<pallas_src>
import functools

import jax
import jax.numpy as jnp
from jax.experimental import pallas as pl
from jax.experimental.pallas import tpu as pltpu


def _soft_ce_kernel(*refs, T, alpha, inv_n, alpha_on, n_valid):
    """Per-row-tile, pre-scaled partial sum of soft CE (+ optional hard CE)."""
    if alpha_on:
        logits_ref, targets_ref, labels_ref, out_ref = refs
    else:
        logits_ref, targets_ref, out_ref = refs
        labels_ref = None

    tile_n, n_classes = logits_ref.shape
    inv_t = 1.0 / T
    s_soft = T * T * inv_n          # scale on the soft term (T^2 / N)
    s_hard = alpha * inv_n          # scale on the hard term (alpha / N)

    # ---- prediction log-softmax at temperature T (f32 compute in VMEM) ----
    zs = logits_ref[...].astype(jnp.float32)
    if T != 1.0:
        zs = zs * inv_t
    zs = zs - jnp.max(zs, axis=-1, keepdims=True)          # (tile_n, C), <= 0
    exp_zs = jnp.exp(zs)
    lse_pred = jnp.log(jnp.sum(exp_zs, axis=-1, keepdims=True))
    logp_pred = zs - lse_pred

    # ---- soft-target softmax at temperature T ----
    zt = targets_ref[...].astype(jnp.float32)
    if T != 1.0:
        zt = zt * inv_t
    zt = zt - jnp.max(zt, axis=-1, keepdims=True)
    p_t = jnp.exp(zt)
    p_t = p_t * pl.reciprocal(jnp.sum(p_t, axis=-1, keepdims=True), approx=True)

    # Fused lane reduction: soft term (and the picked-logit part of the hard term).
    contrib = (-s_soft) * (p_t * logp_pred)                 # (tile_n, C)

    lse_hard = None
    if alpha_on:
        labels = labels_ref[...]                            # (tile_n, 1) int32
        cls = jax.lax.broadcasted_iota(jnp.int32, (tile_n, n_classes), 1)
        onehot = (cls == labels).astype(jnp.float32)        # (tile_n, C)
        # hard CE (T=1): -logp(label) = -(logits[l]-max) + lse(logits-max)
        #              = -T*zs[label] + log(sum(exp(T*zs)))
        contrib = contrib - (s_hard * T) * (onehot * zs)
        if T == 1.0:
            lse_hard = lse_pred                             # reuse the soft pass
        else:
            t_int = int(round(T))
            if abs(T - t_int) < 1e-9 and 1 < t_int <= 8:
                # exp(logits - max_logits) = exp_zs ** T via VPU multiplies
                # (no extra EUP exp sweep; exp_zs in (0,1] so no overflow).
                exp_zh = exp_zs
                for _ in range(t_int - 1):
                    exp_zh = exp_zh * exp_zs
            else:
                exp_zh = jnp.exp(zs * T)
            lse_hard = jnp.log(jnp.sum(exp_zh, axis=-1, keepdims=True))

    row_loss = jnp.sum(contrib, axis=-1, keepdims=True)     # (tile_n, 1)
    if alpha_on:
        row_loss = row_loss + s_hard * lse_hard

    # Mask rows of a (possibly ragged) last tile BEFORE the cross-row sum.
    row = jax.lax.broadcasted_iota(jnp.int32, (tile_n, 1), 0) + pl.program_id(0) * tile_n
    partial = jnp.sum(jnp.where(row < n_valid, row_loss, 0.0))
    out_ref[...] = jnp.broadcast_to(partial, out_ref.shape)


def _vmem_capacity_bytes():
    """Per-core VMEM capacity; conservative fallback if the query is unavailable."""
    try:
        cap = getattr(pltpu.get_tpu_info(), "vmem_capacity_bytes", None)
        if cap:
            return int(cap)
    except Exception:
        pass
    return 64 << 20   # v7x per-TC size: safe lower bound for all generations


def _pick_tile_rows(n_rows, n_classes, itemsize, tile_budget_bytes, max_rows=8192):
    """Largest row tile (multiple of 8) whose *total* VMEM footprint fits the budget.

    Per row we hold: 2 inputs x 2 pipeline buffers in native dtype, plus ~6 live
    f32 (tile, C) intermediates (zs, exp_zs, logp_pred, zt/p_t, contrib, exp_zh).
    """
    per_row = max(n_classes, 1) * (4 * itemsize + 6 * 4)
    t = tile_budget_bytes // per_row
    t = int(max(8, min(max_rows, (t // 8) * 8)))
    if n_rows <= t:
        # Keep >= 2 row tiles for mid/large N so "parallel" can shard across
        # v7x's two TensorCores (harmless on single-TC v5e/v6e).
        if n_rows >= 512:
            half = (((n_rows + 1) // 2) + 7) // 8 * 8
            return int(min(half, t))
        return int(n_rows)   # single tile; block == full array dim is always legal
    return t


def soft_ce_loss(logits, targets, hard_targets=None, *, T=1.0, alpha=1.0,
                 tile_rows=None):
    """Pallas implementation of SoftCELoss.forward (size_average=True).

    logits:       (N, C) float (any float dtype; kept in native dtype in HBM)
    targets:      (N, C) float (soft-target logits)
    hard_targets: (N,) int labels or None
    returns:      scalar float32

    Note: as in the reference, if hard_targets is None the alpha term is
    dropped even when alpha != 0.
    """
    n, c = logits.shape
    with_hard = hard_targets is not None and float(alpha) != 0.0

    vmem_cap = _vmem_capacity_bytes()
    # Scoped VMEM limit for this kernel: well above the 16/32 MiB defaults but
    # safely under physical capacity (128 MiB v5e/v6e, 64 MiB v7x).
    vmem_limit = int(min(100 << 20, int(vmem_cap * 0.85)))
    tile_budget = int(vmem_limit * 0.7)

    if tile_rows is None:
        tile_rows = _pick_tile_rows(n, c, jnp.dtype(logits.dtype).itemsize, tile_budget)
    tile_rows = int(tile_rows)
    grid = pl.cdiv(n, tile_rows)

    kernel = functools.partial(
        _soft_ce_kernel, T=float(T), alpha=float(alpha), inv_n=1.0 / float(n),
        alpha_on=with_hard, n_valid=n,
    )

    in_specs = [
        pl.BlockSpec((tile_rows, c), lambda i: (i, 0)),
        pl.BlockSpec((tile_rows, c), lambda i: (i, 0)),
    ]
    inputs = [logits, targets]
    if with_hard:
        labels = hard_targets.astype(jnp.int32).reshape(n, 1)
        inputs.append(labels)
        in_specs.append(pl.BlockSpec((tile_rows, 1), lambda i: (i, 0)))

    out = pl.pallas_call(
        kernel,
        out_shape=jax.ShapeDtypeStruct((grid, 1, 128), jnp.float32),
        grid_spec=pltpu.PrefetchScalarGridSpec(
            num_scalar_prefetch=0,
            grid=(grid,),
            in_specs=in_specs,
            out_specs=pl.BlockSpec((1, 1, 128), lambda i: (i, 0, 0)),
        ),
        compiler_params=pltpu.CompilerParams(
            dimension_semantics=("parallel",),
            vmem_limit_bytes=vmem_limit,
        ),
    )(*inputs)

    # Constants (T^2, alpha, 1/N) are already folded inside the kernel: just sum
    # the per-tile partials (lane 0 only; all 128 lanes hold the same value).
    return jnp.sum(out[:, 0, 0])


def _reference(logits, targets, hard_targets, T, alpha):
    logits = logits.astype(jnp.float32)
    targets = targets.astype(jnp.float32)
    p_target = jax.nn.softmax(targets / T, axis=1)
    logp_pred = jax.nn.log_softmax(logits / T, axis=1)
    ce = jnp.sum(-p_target * logp_pred, axis=1).mean() * T * T
    if hard_targets is not None and alpha != 0.0:
        lp = jax.nn.log_softmax(logits, axis=1)
        hard = -jnp.take_along_axis(lp, hard_targets[:, None], axis=1)[:, 0].mean()
        ce = ce + alpha * hard
    return ce


if __name__ == "__main__":
    key = jax.random.PRNGKey(0)
    k1, k2, k3, k4, k5, k6 = jax.random.split(key, 6)

    # Case 1: small single-tile problem, T != 1 (integer -> exp**T path), with hard CE.
    n1, c1, t1, a1 = 8, 32, 2.0, 1.0
    logits1 = jax.random.normal(k1, (n1, c1), dtype=jnp.float32)
    targets1 = jax.random.normal(k2, (n1, c1), dtype=jnp.float32)
    hard1 = jax.random.randint(k3, (n1,), 0, c1, dtype=jnp.int32)

    out1 = jax.block_until_ready(soft_ce_loss(logits1, targets1, hard1, T=t1, alpha=a1))
    ref1 = _reference(logits1, targets1, hard1, t1, a1)
    assert jnp.allclose(out1, ref1, atol=1e-3, rtol=1e-3), (out1, ref1)

    # Soft-only path (hard_targets=None): hard-CE pass is skipped at trace time.
    out1b = jax.block_until_ready(soft_ce_loss(logits1, targets1, None, T=t1, alpha=a1))
    ref1b = _reference(logits1, targets1, None, t1, a1)
    assert jnp.allclose(out1b, ref1b, atol=1e-3, rtol=1e-3), (out1b, ref1b)

    # Case 2: multi-tile with a ragged last row tile (50 = 3*16 + 2) and T == 1
    # (exercises the fused soft+hard lane reduction and row masking).
    n2, c2, t2, a2 = 50, 128, 1.0, 0.7
    logits2 = jax.random.normal(k4, (n2, c2), dtype=jnp.float32)
    targets2 = jax.random.normal(k5, (n2, c2), dtype=jnp.float32)
    hard2 = jax.random.randint(k6, (n2,), 0, c2, dtype=jnp.int32)

    out2 = jax.block_until_ready(
        soft_ce_loss(logits2, targets2, hard2, T=t2, alpha=a2, tile_rows=16))
    ref2 = _reference(logits2, targets2, hard2, t2, a2)
    assert jnp.allclose(out2, ref2, atol=1e-3, rtol=1e-3), (out2, ref2)

    # Case 3: bf16 inputs kept in bf16 in HBM, f32 compute in VMEM; non-integer T.
    lb, tb = logits2.astype(jnp.bfloat16), targets2.astype(jnp.bfloat16)
    out3 = jax.block_until_ready(
        soft_ce_loss(lb, tb, hard2, T=1.5, alpha=a2, tile_rows=16))
    ref3 = _reference(lb, tb, hard2, 1.5, a2)
    assert jnp.allclose(out3, ref3, atol=1e-2, rtol=1e-2), (out3, ref3)

    print("KERNEL_OK")
</pallas_src>

<mosaic_0001>
module attributes {stable_mosaic.version = 11 : i64} {
  func.func @_soft_ce_kernel(%arg0: i32, %arg1: memref<8x32xf32, #tpu.memory_space<vmem>>, %arg2: memref<8x32xf32, #tpu.memory_space<vmem>>, %arg3: memref<8x1xi32, #tpu.memory_space<vmem>>, %arg4: memref<1x1x128xf32, #tpu.memory_space<vmem>>) attributes {dimension_semantics = [#tpu.dimension_semantics<parallel>], iteration_bounds = array<i64: 1>, scalar_prefetch = 0 : i64, scratch_operands = 0 : i64, tpu.core_type = #tpu.core_type<tc>, window_params = [{transform_indices = @transform_0, window_bounds = array<i64: 8, 32>}, {transform_indices = @transform_1, window_bounds = array<i64: 8, 32>}, {transform_indices = @transform_2, window_bounds = array<i64: 8, 1>}, {transform_indices = @transform_3, window_bounds = array<i64: 1, 1, 128>}]} {
    %c0 = arith.constant 0 : index
    %c0_0 = arith.constant 0 : index
    %0 = vector.load %arg1[%c0, %c0_0] : memref<8x32xf32, #tpu.memory_space<vmem>>, vector<8x32xf32>
    %cst = arith.constant 5.000000e-01 : f32
    %1 = vector.broadcast %cst : f32 to vector<8x32xf32>
    %2 = arith.mulf %0, %1 : vector<8x32xf32>
    %cst_1 = arith.constant dense<0xFF800000> : vector<8xf32>
    %3 = vector.multi_reduction <maximumf>, %2, %cst_1 [1] : vector<8x32xf32> to vector<8xf32>
    %4 = vector.shape_cast %3 : vector<8xf32> to vector<8x1xf32>
    %5 = vector.broadcast %4 : vector<8x1xf32> to vector<8x32xf32>
    %6 = arith.subf %2, %5 : vector<8x32xf32>
    %7 = math.exp %6 : vector<8x32xf32>
    %cst_2 = arith.constant dense<0.000000e+00> : vector<8xf32>
    %8 = vector.multi_reduction <add>, %7, %cst_2 [1] : vector<8x32xf32> to vector<8xf32>
    %9 = vector.shape_cast %8 : vector<8xf32> to vector<8x1xf32>
    %10 = math.log %9 : vector<8x1xf32>
    %11 = vector.broadcast %10 : vector<8x1xf32> to vector<8x32xf32>
    %12 = arith.subf %6, %11 : vector<8x32xf32>
    %c0_3 = arith.constant 0 : index
    %c0_4 = arith.constant 0 : index
    %13 = vector.load %arg2[%c0_3, %c0_4] : memref<8x32xf32, #tpu.memory_space<vmem>>, vector<8x32xf32>
    %cst_5 = arith.constant 5.000000e-01 : f32
    %14 = vector.broadcast %cst_5 : f32 to vector<8x32xf32>
    %15 = arith.mulf %13, %14 : vector<8x32xf32>
    %cst_6 = arith.constant dense<0xFF800000> : vector<8xf32>
    %16 = vector.multi_reduction <maximumf>, %15, %cst_6 [1] : vector<8x32xf32> to vector<8xf32>
    %17 = vector.shape_cast %16 : vector<8xf32> to vector<8x1xf32>
    %18 = vector.broadcast %17 : vector<8x1xf32> to vector<8x32xf32>
    %19 = arith.subf %15, %18 : vector<8x32xf32>
    %20 = math.exp %19 : vector<8x32xf32>
    %cst_7 = arith.constant dense<0.000000e+00> : vector<8xf32>
    %21 = vector.multi_reduction <add>, %20, %cst_7 [1] : vector<8x32xf32> to vector<8xf32>
    %22 = vector.shape_cast %21 : vector<8xf32> to vector<8x1xf32>
    %23 = tpu.reciprocal %22 {approx = true} : vector<8x1xf32> -> vector<8x1xf32>
    %24 = vector.broadcast %23 : vector<8x1xf32> to vector<8x32xf32>
    %25 = arith.mulf %20, %24 : vector<8x32xf32>
    %26 = arith.mulf %25, %12 : vector<8x32xf32>
    %cst_8 = arith.constant -5.000000e-01 : f32
    %27 = vector.broadcast %cst_8 : f32 to vector<8x32xf32>
    %28 = arith.mulf %27, %26 : vector<8x32xf32>
    %c0_9 = arith.constant 0 : index
    %c0_10 = arith.constant 0 : index
    %29 = vector.load %arg3[%c0_9, %c0_10] : memref<8x1xi32, #tpu.memory_space<vmem>>, vector<8x1xi32>
    %30 = tpu.iota {dimensions = array<i32: 1>} : vector<8x32xi32>
    %31 = vector.broadcast %29 : vector<8x1xi32> to vector<8x32xi32>
    %32 = arith.cmpi eq, %30, %31 : vector<8x32xi32>
    %33 = arith.extui %32 : vector<8x32xi1> to vector<8x32xi32>
    %34 = arith.sitofp %33 : vector<8x32xi32> to vector<8x32xf32>
    %35 = arith.mulf %34, %6 : vector<8x32xf32>
    %cst_11 = arith.constant 2.500000e-01 : f32
    %36 = vector.broadcast %cst_11 : f32 to vector<8x32xf32>
    %37 = arith.mulf %36, %35 : vector<8x32xf32>
    %38 = arith.subf %28, %37 : vector<8x32xf32>
    %39 = arith.mulf %7, %7 : vector<8x32xf32>
    %cst_12 = arith.constant dense<0.000000e+00> : vector<8xf32>
    %40 = vector.multi_reduction <add>, %39, %cst_12 [1] : vector<8x32xf32> to vector<8xf32>
    %41 = vector.shape_cast %40 : vector<8xf32> to vector<8x1xf32>
    %42 = math.log %41 : vector<8x1xf32>
    %cst_13 = arith.constant dense<0.000000e+00> : vector<8xf32>
    %43 = vector.multi_reduction <add>, %38, %cst_13 [1] : vector<8x32xf32> to vector<8xf32>
    %44 = vector.shape_cast %43 : vector<8xf32> to vector<8x1xf32>
    %cst_14 = arith.constant 1.250000e-01 : f32
    %45 = vector.broadcast %cst_14 : f32 to vector<8x1xf32>
    %46 = arith.mulf %45, %42 : vector<8x1xf32>
    %47 = arith.addf %44, %46 : vector<8x1xf32>
    %48 = tpu.iota {dimensions = array<i32: 0>} : vector<8x1xi32>
    %c8_i32 = arith.constant 8 : i32
    %49 = arith.muli %arg0, %c8_i32 : i32
    %50 = vector.broadcast %49 : i32 to vector<8x1xi32>
    %51 = arith.addi %48, %50 : vector<8x1xi32>
    %c8_i32_15 = arith.constant 8 : i32
    %52 = vector.broadcast %c8_i32_15 : i32 to vector<8x1xi32>
    %53 = arith.cmpi slt, %51, %52 : vector<8x1xi32>
    %cst_16 = arith.constant 0.000000e+00 : f32
    %54 = vector.broadcast %cst_16 : f32 to vector<8x1xf32>
    %55 = arith.select %53, %47, %54 : vector<8x1xi1>, vector<8x1xf32>
    %56 = vector.shape_cast %55 : vector<8x1xf32> to vector<1x8x1xf32>
    %cst_17 = arith.constant dense<0.000000e+00> : vector<1xf32>
    %57 = vector.multi_reduction <add>, %56, %cst_17 [1, 2] : vector<1x8x1xf32> to vector<1xf32>
    %58 = vector.shape_cast %57 : vector<1xf32> to vector<1x1x1xf32>
    %59 = vector.extract %58[0, 0, 0] : f32 from vector<1x1x1xf32>
    %60 = vector.broadcast %59 : f32 to vector<1x1x128xf32>
    %c0_18 = arith.constant 0 : index
    %c0_19 = arith.constant 0 : index
    %c0_20 = arith.constant 0 : index
    %61 = vector.load %arg4[%c0_18, %c0_19, %c0_20] : memref<1x1x128xf32, #tpu.memory_space<vmem>>, vector<1x1x128xf32>
    tpu.vector_store %arg4[%c0_18, %c0_19, %c0_20], %60 {strides = array<i32>} : memref<1x1x128xf32, #tpu.memory_space<vmem>>, vector<1x1x128xf32>,
    return
  }
  func.func @transform_0(%arg0: i32) -> (i32, i32) {
    %c0_i32 = arith.constant 0 : i32
    %c0_i32_0 = arith.constant 0 : i32
    return %arg0, %c0_i32 : i32, i32
  }
  func.func @transform_1(%arg0: i32) -> (i32, i32) {
    %c0_i32 = arith.constant 0 : i32
    %c0_i32_0 = arith.constant 0 : i32
    return %arg0, %c0_i32 : i32, i32
  }
  func.func @transform_2(%arg0: i32) -> (i32, i32) {
    %c0_i32 = arith.constant 0 : i32
    %c0_i32_0 = arith.constant 0 : i32
    return %arg0, %c0_i32 : i32, i32
  }
  func.func @transform_3(%arg0: i32) -> (i32, i32, i32) {
    %c0_i32 = arith.constant 0 : i32
    %c0_i32_0 = arith.constant 0 : i32
    %c0_i32_1 = arith.constant 0 : i32
    return %arg0, %c0_i32, %c0_i32_0 : i32, i32, i32
  }
}

</mosaic_0001>

<llo_original>
// kernel: tpu_custom_call.1
$region0: #{tpu_custom_call.1}
  #allocation0 [shape = 'u32[]', space=smem, size = 0x4, offset = 0x4, fixed_abs, tag = 'smem constant byte address 0x4 - core index']
  #allocation1 [shape = 'u32[144,128]{1,0:T(1,128)}', space=vmem, size = 0x12000, scoped, tag = 'internal scratch']
  %s0 = inlined_call_operand.vmem [shape: f32[8,32], index: 0, kind: input, shape index: {}]
  %s1 = inlined_call_operand.hbm [shape: f32[8,32], index: 1, kind: input, shape index: {}]
  %s2 = inlined_call_operand.vmem [shape: s32[8,1], index: 2, kind: input, shape index: {}]
  %s3 = inlined_call_operand.hbm [shape: f32[1,1,128], index: 3, kind: output, shape index: {}]
  %s4 = sld [smem:[#allocation0]]
  $region26: #{tpu_custom_call.1} parent=0
    _
  %s6 = ssub.s32 1, %s4
  %s7 = scalar_select 0, %s6, %s4
  $region1: #{tpu_custom_call.1} parent=0
    #allocation2 [shape = 'u8[4096]{0}', space=vmem, size = 0x1000, scoped, tag = 'input window, operand 1, single buffered']
    #allocation3 [shape = 's32[1]{0}', space=sflag, size = 0x4, scoped, tag = 'scoped memory for tpu_custom_call.1']
    #allocation4 [shape = 's32[1]{0}', space=sflag, size = 0x4, scoped, tag = 'scoped memory for tpu_custom_call.1']
    #allocation5 [shape = 'u8[512]{0}', space=vmem, size = 0x400, scoped, tag = 'output window, operand 0, single buffered']
    %8 = vsyncpa [#allocation3], 0
    %9 = vsyncpa [#allocation4], 0
    // Predicated region
    $region2: #{tpu_custom_call.1} parent=1 // pred_check
      _
    $region3: #{tpu_custom_call.1} parent=1 // pred_check_branch
      %11 = sbr.rel (0) target = $region5
    $region4: #{tpu_custom_call.1} parent=1 // pred_region
      _
    $region5: #{tpu_custom_call.1} parent=1 // pred_fallthru
      _
    // Predicated region
    $region6: #{tpu_custom_call.1} parent=1 // pred_check
      _
    $region7: #{tpu_custom_call.1} parent=1 // pred_check_branch
      %13 = sbr.rel (0) target = $region9
    $region8: #{tpu_custom_call.1} parent=1 // pred_region
      %s15 = ssub.s32 128, 128
      %16 = vsyncadd [#allocation3], %s15
      %s18 = sshll.u32 [#allocation2], 4
      %s19 = int_to_ptr.vmem [resolvable:$true] %s18
      %21 = dma.hbm_to_vmem [thread:$0]  %s1, 128, %s19, [#allocation3]
    $region9: #{tpu_custom_call.1} parent=1 // pred_fallthru
      _
    // Predicated region
    $region10: #{tpu_custom_call.1} parent=1 // pred_check
      _
    $region11: #{tpu_custom_call.1} parent=1 // pred_check_branch
      %23 = sbr.rel (0) target = $region13
    $region12: #{tpu_custom_call.1} parent=1 // pred_region
      _
    $region13: #{tpu_custom_call.1} parent=1 // pred_fallthru
      _
    // Predicated region
    $region14: #{tpu_custom_call.1} parent=1 // pred_check
      _
    $region15: #{tpu_custom_call.1} parent=1 // pred_check_branch
      %25 = sbr.rel (0) target = $region17
    $region16: #{tpu_custom_call.1} parent=1 // pred_region
      %26 = dma.done [#allocation3], 128
    $region17: #{tpu_custom_call.1} parent=1 // pred_fallthru
      _
    %v27 = vld [vmem:[%s0] sm:$0xff]
    %v28 = vmul.f32 %v27, 0.5
    %vm29 = vcmask 261120
    %v30 = vsel %vm29, %v28, -inf
    %31 = vmax.xlane.f32.xlu0 %v30
    %v32 = vpop.xlane.xlu0 %31
    %v33 = vsub.f32 %v28, %v32
    %v34 = vmul.f32 %v33, 1.442695
    %v35 = vpow.pop %v34
    %v36 = vsel %vm29, %v35, 0.0
    %37 = vadd.xlane.f32.xlu0 %v36
    %v38 = vpop.xlane.xlu0 %37
    %v39 = vlog2.pop %v38
    %v40 = vmul.f32 %v39, 0.6931472
    %v41 = vsub.f32 %v33, %v40
    %v42 = vld [vmem:[#allocation2] sm:$0xff]
    %v43 = vmul.f32 %v42, 0.5
    %v44 = vsel %vm29, %v43, -inf
    %45 = vmax.xlane.f32.xlu0 %v44
    %v46 = vpop.xlane.xlu0 %45
    %v47 = vsub.f32 %v43, %v46
    %v48 = vmul.f32 %v47, 1.442695
    %v49 = vpow.pop %v48
    %v50 = vsel %vm29, %v49, 0.0
    %51 = vadd.xlane.f32.xlu0 %v50
    %v52 = vpop.xlane.xlu0 %51
    %v53 = vrcp.pop %v52
    %v54 = vmul.f32 %v49, %v53
    %v55 = vmul.f32 %v54, %v41
    %v56 = vmul.f32 %v55, -0.5
    %v57 = vld [vmem:[%s2] sm:$0xff]
    %v58 = vlaneseq
    %v59 = vand.u32 %v58, 127
    %60 = vset.pattern.permute.xlu0 0
    %61 = vperm.xlu0 %60, %v57
    %v62 = vpop.permute.xlu0 %61
    %vm63 = vcmp.eq.s32.totalorder %v59, %v62
    %v64 = vsel %vm63, 1, 0
    %v65 = vcvt.s32.f32 %v64
    %v66 = vmul.f32 %v65, %v33
    %v67 = vmul.f32 %v66, 0.25
    %v68 = vsub.f32 %v56, %v67
    %v69 = vmul.f32 %v35, %v35
    %v70 = vsel %vm29, %v69, 0.0
    %71 = vadd.xlane.f32.xlu0 %v70
    %v72 = vpop.xlane.xlu0 %71
    %v73 = vlog2.pop %v72
    %v74 = vmul.f32 %v73, 0.6931472
    %v75 = vsel %vm29, %v68, 0.0
    %76 = vadd.xlane.f32.xlu0 %v75
    %v77 = vpop.xlane.xlu0 %76
    %v78 = vmul.f32 %v74, 0.125
    %v79 = vadd.f32 %v77, %v78
    %v80 = vlaneseq
    %v81 = vshrl.u32 %v80, 7
    %s82 = smul.u32 0, 8
    %v83 = vstv %s82
    %v84 = vadd.s32 %v81, %v83
    %vm85 = vcmp.lt.s32.totalorder %v84, 8
    %v86 = vsel %vm85, %v79, 0.0
    %vm87 = vcmask 7168
    %v88 = vsel %vm87, %v86, 0.0
    %89 = vadd.xlane.f32.xlu0 %v88
    %v90 = vpop.xlane.xlu0 %89
    %v91 = vrot.slane %v90, 4
    %v92 = vadd.f32 %v90, %v91
    %v93 = vrot.slane %v92, 2
    %v94 = vadd.f32 %v92, %v93
    %v95 = vrot.slane %v94, 1
    %v96 = vadd.f32 %v94, %v95
    %s97 = vtos %v96
    %v98 = vstv %s97
    %99 = vst [vmem:[#allocation5] sm:$0x1] %v98
    // Predicated region
    $region18: #{tpu_custom_call.1} parent=1 // pred_check
      _
    $region19: #{tpu_custom_call.1} parent=1 // pred_check_branch
      %101 = sbr.rel (0) target = $region21
    $region20: #{tpu_custom_call.1} parent=1 // pred_region
      %s103 = ssub.s32 16, 16
      %104 = vsyncadd [#allocation4], %s103
      %s106 = sshll.u32 [#allocation5], 4
      %s107 = int_to_ptr.vmem [resolvable:$true] %s106
      %109 = dma.vmem_to_hbm [thread:$0]  %s107, 16, %s3, [#allocation4]
    $region21: #{tpu_custom_call.1} parent=1 // pred_fallthru
      _
    // Predicated region
    $region22: #{tpu_custom_call.1} parent=1 // pred_check
      _
    $region23: #{tpu_custom_call.1} parent=1 // pred_check_branch
      %111 = sbr.rel (0) target = $region25
    $region24: #{tpu_custom_call.1} parent=1 // pred_region
      %112 = dma.done [#allocation4], 16
    $region25: #{tpu_custom_call.1} parent=1 // pred_fallthru
      _
    %113 = vsyncpa [#allocation3], 1
    %114 = vsyncpa [#allocation4], 1

</llo_original>
